<compile_context>
chip_gen: v7x
topology: tpu7x:2x2x1
jax: 0.10.0
libtpu: 0.0.40
codegen_flags: <defaults>
</compile_context>

<pallas_src>
import functools

import numpy as np
import jax
import jax.numpy as jnp
from jax.experimental import pallas as pl
from jax.experimental.pallas import tpu as pltpu


# ----------------------------------------------------------------------------
# Pallas kernel: fused 3-layer MLP (the whole Critic forward) for one batch tile.
# ----------------------------------------------------------------------------
def critic_kernel(state_ref, action_ref,
                  w0_ref, b0_ref,
                  w1s_ref, w1a_ref, b1_ref,
                  wo_ref, bo_ref,
                  out_ref):
    # Cast activations to bf16 for the MXU; all accumulation is f32.
    s = state_ref[...].astype(jnp.bfloat16)    # (TB, S)
    a = action_ref[...].astype(jnp.bfloat16)   # (TB, A)

    # layer 0: relu(state @ W0 + b0)
    h0 = jnp.dot(s, w0_ref[...], preferred_element_type=jnp.float32) + b0_ref[...]
    h0 = jnp.maximum(h0, 0.0).astype(jnp.bfloat16)

    # layer 1: relu(cat(h0, action) @ W1 + b1) == relu(h0 @ W1s + a @ W1a + b1)
    h1 = (jnp.dot(h0, w1s_ref[...], preferred_element_type=jnp.float32)
          + jnp.dot(a, w1a_ref[...], preferred_element_type=jnp.float32)
          + b1_ref[...])
    h1 = jnp.maximum(h1, 0.0)                  # (TB, H2) f32

    # transposed Q head: (1,H2) @ (H2,TB) -> lane-dense (1,TB) row, no padding.
    h1t = h1.T.astype(jnp.bfloat16)            # f32 transpose (XLU), then cast
    q = (jnp.dot(wo_ref[...], h1t, preferred_element_type=jnp.float32)
         + bo_ref[...])                        # (1, TB) + (1, 1) broadcast
    out_ref[...] = q.astype(out_ref.dtype)


def _round_up(x, m):
    return (x + m - 1) // m * m


# ----------------------------------------------------------------------------
# Wrapper: pick a large batch tile, pad, run the grid, slice the real rows.
# ----------------------------------------------------------------------------
@functools.partial(jax.jit, static_argnames=("tile_b",))
def critic_forward(state, action, params, *, tile_b=512):
    """state: (B, S), action: (B, A) -> (B, 1) f32 q-values."""
    B, S = state.shape
    A = action.shape[1]
    H1 = params["w0"].shape[1]
    H2 = params["w1s"].shape[1]

    # Effective batch tile: capped at tile_b, multiple of 128 (it is the lane
    # dim of the (1, tile) output block), and sized ~half the batch for small
    # B so the grid stays >= 2 where possible (both v7x TCs get work; grid=1
    # is fine on single-TC v5e/v6e).
    assert tile_b % 128 == 0, "batch tile must be lane-aligned (multiple of 128)"
    half = _round_up(pl.cdiv(B, 2), 128)
    tile = max(128, min(tile_b, half))
    b_pad = _round_up(B, tile)
    n_tiles = b_pad // tile

    if b_pad != B:
        state = jnp.pad(state, ((0, b_pad - B), (0, 0)))
        action = jnp.pad(action, ((0, b_pad - B), (0, 0)))

    args = (state, action,
            params["w0"], params["b0"],
            params["w1s"], params["w1a"], params["b1"],
            params["wo_t"], params["bo"])

    batch_map = lambda i: (i, 0)   # tiles the batch axis of the inputs
    out_map = lambda i: (0, i)     # lane-dense (1, tile) slab of the q row
    resident = lambda i: (0, 0)    # weights stay VMEM-resident across the grid

    in_specs = [
        pl.BlockSpec((tile, S), batch_map),
        pl.BlockSpec((tile, A), batch_map),
        pl.BlockSpec((S, H1), resident),
        pl.BlockSpec((1, H1), resident),
        pl.BlockSpec((H1, H2), resident),
        pl.BlockSpec((A, H2), resident),
        pl.BlockSpec((1, H2), resident),
        pl.BlockSpec((1, H2), resident),   # wo stored transposed: (1, H2)
        pl.BlockSpec((1, 1), resident),
    ]
    out_specs = pl.BlockSpec((1, tile), out_map)

    # Honest scheduler hint: real flops (single output column) and real bytes
    # (actual input/weight dtypes + the un-padded (1, b_pad) f32 output).
    flops = 2 * b_pad * (S * H1 + H1 * H2 + A * H2 + H2 * 1)
    bytes_accessed = int(
        sum(int(np.prod(x.shape)) * x.dtype.itemsize for x in args)
        + b_pad * 4)

    out = pl.pallas_call(
        critic_kernel,
        out_shape=jax.ShapeDtypeStruct((1, b_pad), jnp.float32),
        grid=(n_tiles,),
        in_specs=in_specs,
        out_specs=out_specs,
        compiler_params=pltpu.CompilerParams(
            dimension_semantics=("parallel",)),   # megacore split on v7x
        cost_estimate=pl.CostEstimate(
            flops=flops, transcendentals=0, bytes_accessed=bytes_accessed),
    )(*args)

    return out[0, :B].reshape(B, 1)


# ----------------------------------------------------------------------------
# Deterministic parameter construction (mirrors Critic.__init__ shapes / init).
# ----------------------------------------------------------------------------
def make_params(key, state_size, action_size, hidden_layers,
                weight_dtype=jnp.bfloat16):
    h1, h2 = hidden_layers  # the reference Critic is used with 2 hidden layers

    k0, k1, k2, kb0, kb1, kb2 = jax.random.split(key, 6)

    # PyTorch init_layers: lim = 1/sqrt(weight.size(0)) = 1/sqrt(out_features)
    lim0 = 1.0 / np.sqrt(h1)
    lim1 = 1.0 / np.sqrt(h2)

    # Weights stored pre-transposed as (in_features, out_features).
    w0 = jax.random.uniform(k0, (state_size, h1), jnp.float32, -lim0, lim0)
    w1 = jax.random.uniform(k1, (h1 + action_size, h2), jnp.float32, -lim1, lim1)
    wo = jax.random.uniform(k2, (h2, 1), jnp.float32, -3e-3, 3e-3)

    # Biases (PyTorch default Linear bias init: uniform(+-1/sqrt(fan_in))).
    b0 = jax.random.uniform(kb0, (1, h1), jnp.float32,
                            -1.0 / np.sqrt(state_size), 1.0 / np.sqrt(state_size))
    b1 = jax.random.uniform(kb1, (1, h2), jnp.float32,
                            -1.0 / np.sqrt(h1 + action_size),
                            1.0 / np.sqrt(h1 + action_size))
    bo = jax.random.uniform(kb2, (1, 1), jnp.float32,
                            -1.0 / np.sqrt(h2), 1.0 / np.sqrt(h2))

    # Split W1 so cat(h0, action) @ W1 becomes h0 @ W1s + action @ W1a.
    w1s, w1a = w1[:h1, :], w1[h1:, :]

    return {
        "w0": w0.astype(weight_dtype),
        "b0": b0,                                 # biases stay f32
        "w1s": w1s.astype(weight_dtype),
        "w1a": w1a.astype(weight_dtype),
        "b1": b1,
        "wo_t": wo.T.astype(weight_dtype),        # (1, H2): row-form Q head
        "bo": bo,                                 # (1, 1) f32
    }


def reference_forward(state, action, params):
    """Plain-JAX reference matching the PyTorch forward (same bf16/f32 policy)."""
    s = state.astype(jnp.bfloat16)
    a = action.astype(jnp.bfloat16)

    h0 = jnp.dot(s, params["w0"], preferred_element_type=jnp.float32) + params["b0"]
    h0 = jax.nn.relu(h0).astype(jnp.bfloat16)

    x = jnp.concatenate([h0, a], axis=1)
    w1_full = jnp.concatenate([params["w1s"], params["w1a"]], axis=0)
    h1 = jnp.dot(x, w1_full, preferred_element_type=jnp.float32) + params["b1"]
    h1 = jax.nn.relu(h1).astype(jnp.bfloat16)

    q = (jnp.dot(h1, params["wo_t"].T, preferred_element_type=jnp.float32)
         + params["bo"])
    return q


if __name__ == "__main__":
    key = jax.random.PRNGKey(0)
    k_state, k_action, k_params = jax.random.split(key, 3)

    # Small-but-grid-exercising shapes consistent with the module.
    batch = 256
    state_size = 16
    action_size = 8
    hidden_layers = (32, 32)

    state = jax.random.normal(k_state, (batch, state_size), jnp.float32)
    action = jax.random.normal(k_action, (batch, action_size), jnp.float32)

    params = make_params(k_params, state_size, action_size, hidden_layers)

    # Default tile cap 512; for batch=256 the wrapper picks tile=128, grid=2.
    q = critic_forward(state, action, params)
    q = jax.block_until_ready(q)
    assert q.shape == (batch, 1)

    q_ref = reference_forward(state, action, params)
    np.testing.assert_allclose(np.asarray(q), np.asarray(q_ref),
                               rtol=1e-3, atol=1e-4)

    print("KERNEL_OK")
</pallas_src>

<mosaic_0001>
module attributes {stable_mosaic.version = 11 : i64} {
  func.func @critic_kernel(%arg0: i32, %arg1: memref<128x16xf32, #tpu.memory_space<vmem>>, %arg2: memref<128x8xf32, #tpu.memory_space<vmem>>, %arg3: memref<16x32xbf16, #tpu.memory_space<vmem>>, %arg4: memref<1x32xf32, #tpu.memory_space<vmem>>, %arg5: memref<32x32xbf16, #tpu.memory_space<vmem>>, %arg6: memref<8x32xbf16, #tpu.memory_space<vmem>>, %arg7: memref<1x32xf32, #tpu.memory_space<vmem>>, %arg8: memref<1x32xbf16, #tpu.memory_space<vmem>>, %arg9: memref<1x1xf32, #tpu.memory_space<vmem>>, %arg10: memref<1x128xf32, #tpu.memory_space<vmem>>) attributes {dimension_semantics = [#tpu.dimension_semantics<parallel>], iteration_bounds = array<i64: 2>, scalar_prefetch = 0 : i64, scratch_operands = 0 : i64, tpu.core_type = #tpu.core_type<tc>, window_params = [{transform_indices = @transform_0, window_bounds = array<i64: 128, 16>}, {transform_indices = @transform_1, window_bounds = array<i64: 128, 8>}, {pipeline_mode = #tpu.pipeline_mode<synchronous>, transform_indices = @transform_2, window_bounds = array<i64: 16, 32>}, {pipeline_mode = #tpu.pipeline_mode<synchronous>, transform_indices = @transform_3, window_bounds = array<i64: 1, 32>}, {pipeline_mode = #tpu.pipeline_mode<synchronous>, transform_indices = @transform_4, window_bounds = array<i64: 32, 32>}, {pipeline_mode = #tpu.pipeline_mode<synchronous>, transform_indices = @transform_5, window_bounds = array<i64: 8, 32>}, {pipeline_mode = #tpu.pipeline_mode<synchronous>, transform_indices = @transform_6, window_bounds = array<i64: 1, 32>}, {pipeline_mode = #tpu.pipeline_mode<synchronous>, transform_indices = @transform_7, window_bounds = array<i64: 1, 32>}, {pipeline_mode = #tpu.pipeline_mode<synchronous>, transform_indices = @transform_8, window_bounds = array<i64: 1, 1>}, {transform_indices = @transform_9, window_bounds = array<i64: 1, 128>}]} {
    %c0 = arith.constant 0 : index
    %c0_0 = arith.constant 0 : index
    %0 = vector.load %arg1[%c0, %c0_0] : memref<128x16xf32, #tpu.memory_space<vmem>>, vector<128x16xf32>
    %1 = arith.truncf %0 : vector<128x16xf32> to vector<128x16xbf16>
    %c0_1 = arith.constant 0 : index
    %c0_2 = arith.constant 0 : index
    %2 = vector.load %arg2[%c0_1, %c0_2] : memref<128x8xf32, #tpu.memory_space<vmem>>, vector<128x8xf32>
    %3 = arith.truncf %2 : vector<128x8xf32> to vector<128x8xbf16>
    %c0_3 = arith.constant 0 : index
    %c0_4 = arith.constant 0 : index
    %4 = vector.load %arg3[%c0_3, %c0_4] : memref<16x32xbf16, #tpu.memory_space<vmem>>, vector<16x32xbf16>
    %cst = arith.constant dense<0.000000e+00> : vector<128x32xf32>
    %5 = tpu.matmul %1, %4, %cst {dimension_numbers = #tpu.dot_dimension_numbers<[1], [0], [0], [1], [0, 0, 1, 1], [], []>} : vector<128x16xbf16>, vector<16x32xbf16>, vector<128x32xf32> -> vector<128x32xf32>
    %c0_5 = arith.constant 0 : index
    %c0_6 = arith.constant 0 : index
    %6 = vector.load %arg4[%c0_5, %c0_6] : memref<1x32xf32, #tpu.memory_space<vmem>>, vector<1x32xf32>
    %7 = vector.broadcast %6 : vector<1x32xf32> to vector<128x32xf32>
    %8 = arith.addf %5, %7 : vector<128x32xf32>
    %cst_7 = arith.constant 0.000000e+00 : f32
    %9 = vector.broadcast %cst_7 : f32 to vector<128x32xf32>
    %10 = arith.maximumf %8, %9 : vector<128x32xf32>
    %11 = arith.truncf %10 : vector<128x32xf32> to vector<128x32xbf16>
    %c0_8 = arith.constant 0 : index
    %c0_9 = arith.constant 0 : index
    %12 = vector.load %arg5[%c0_8, %c0_9] : memref<32x32xbf16, #tpu.memory_space<vmem>>, vector<32x32xbf16>
    %cst_10 = arith.constant dense<0.000000e+00> : vector<128x32xf32>
    %13 = tpu.matmul %11, %12, %cst_10 {dimension_numbers = #tpu.dot_dimension_numbers<[1], [0], [0], [1], [0, 0, 1, 1], [], []>} : vector<128x32xbf16>, vector<32x32xbf16>, vector<128x32xf32> -> vector<128x32xf32>
    %c0_11 = arith.constant 0 : index
    %c0_12 = arith.constant 0 : index
    %14 = vector.load %arg6[%c0_11, %c0_12] : memref<8x32xbf16, #tpu.memory_space<vmem>>, vector<8x32xbf16>
    %cst_13 = arith.constant dense<0.000000e+00> : vector<128x32xf32>
    %15 = tpu.matmul %3, %14, %cst_13 {dimension_numbers = #tpu.dot_dimension_numbers<[1], [0], [0], [1], [0, 0, 1, 1], [], []>} : vector<128x8xbf16>, vector<8x32xbf16>, vector<128x32xf32> -> vector<128x32xf32>
    %16 = arith.addf %13, %15 : vector<128x32xf32>
    %c0_14 = arith.constant 0 : index
    %c0_15 = arith.constant 0 : index
    %17 = vector.load %arg7[%c0_14, %c0_15] : memref<1x32xf32, #tpu.memory_space<vmem>>, vector<1x32xf32>
    %18 = vector.broadcast %17 : vector<1x32xf32> to vector<128x32xf32>
    %19 = arith.addf %16, %18 : vector<128x32xf32>
    %cst_16 = arith.constant 0.000000e+00 : f32
    %20 = vector.broadcast %cst_16 : f32 to vector<128x32xf32>
    %21 = arith.maximumf %19, %20 : vector<128x32xf32>
    %22 = tpu.transpose %21, [1, 0] : vector<128x32xf32> -> vector<32x128xf32>
    %23 = arith.truncf %22 : vector<32x128xf32> to vector<32x128xbf16>
    %c0_17 = arith.constant 0 : index
    %c0_18 = arith.constant 0 : index
    %24 = vector.load %arg8[%c0_17, %c0_18] : memref<1x32xbf16, #tpu.memory_space<vmem>>, vector<1x32xbf16>
    %cst_19 = arith.constant dense<0.000000e+00> : vector<1x128xf32>
    %25 = tpu.matmul %24, %23, %cst_19 {dimension_numbers = #tpu.dot_dimension_numbers<[1], [0], [0], [1], [0, 0, 1, 1], [], []>} : vector<1x32xbf16>, vector<32x128xbf16>, vector<1x128xf32> -> vector<1x128xf32>
    %c0_20 = arith.constant 0 : index
    %c0_21 = arith.constant 0 : index
    %26 = vector.load %arg9[%c0_20, %c0_21] : memref<1x1xf32, #tpu.memory_space<vmem>>, vector<1x1xf32>
    %27 = vector.broadcast %26 : vector<1x1xf32> to vector<1x128xf32>
    %28 = arith.addf %25, %27 : vector<1x128xf32>
    %c0_22 = arith.constant 0 : index
    %c0_23 = arith.constant 0 : index
    %29 = vector.load %arg10[%c0_22, %c0_23] : memref<1x128xf32, #tpu.memory_space<vmem>>, vector<1x128xf32>
    tpu.vector_store %arg10[%c0_22, %c0_23], %28 {strides = array<i32>} : memref<1x128xf32, #tpu.memory_space<vmem>>, vector<1x128xf32>,
    return
  }
  func.func @transform_0(%arg0: i32) -> (i32, i32) {
    %c0_i32 = arith.constant 0 : i32
    %c0_i32_0 = arith.constant 0 : i32
    return %arg0, %c0_i32 : i32, i32
  }
  func.func @transform_1(%arg0: i32) -> (i32, i32) {
    %c0_i32 = arith.constant 0 : i32
    %c0_i32_0 = arith.constant 0 : i32
    return %arg0, %c0_i32 : i32, i32
  }
  func.func @transform_2(%arg0: i32) -> (i32, i32) {
    %c0_i32 = arith.constant 0 : i32
    %c0_i32_0 = arith.constant 0 : i32
    %c0_i32_1 = arith.constant 0 : i32
    return %c0_i32, %c0_i32_0 : i32, i32
  }
  func.func @transform_3(%arg0: i32) -> (i32, i32) {
    %c0_i32 = arith.constant 0 : i32
    %c0_i32_0 = arith.constant 0 : i32
    %c0_i32_1 = arith.constant 0 : i32
    return %c0_i32, %c0_i32_0 : i32, i32
  }
  func.func @transform_4(%arg0: i32) -> (i32, i32) {
    %c0_i32 = arith.constant 0 : i32
    %c0_i32_0 = arith.constant 0 : i32
    %c0_i32_1 = arith.constant 0 : i32
    return %c0_i32, %c0_i32_0 : i32, i32
  }
  func.func @transform_5(%arg0: i32) -> (i32, i32) {
    %c0_i32 = arith.constant 0 : i32
    %c0_i32_0 = arith.constant 0 : i32
    %c0_i32_1 = arith.constant 0 : i32
    return %c0_i32, %c0_i32_0 : i32, i32
  }
  func.func @transform_6(%arg0: i32) -> (i32, i32) {
    %c0_i32 = arith.constant 0 : i32
    %c0_i32_0 = arith.constant 0 : i32
    %c0_i32_1 = arith.constant 0 : i32
    return %c0_i32, %c0_i32_0 : i32, i32
  }
  func.func @transform_7(%arg0: i32) -> (i32, i32) {
    %c0_i32 = arith.constant 0 : i32
    %c0_i32_0 = arith.constant 0 : i32
    %c0_i32_1 = arith.constant 0 : i32
    return %c0_i32, %c0_i32_0 : i32, i32
  }
  func.func @transform_8(%arg0: i32) -> (i32, i32) {
    %c0_i32 = arith.constant 0 : i32
    %c0_i32_0 = arith.constant 0 : i32
    %c0_i32_1 = arith.constant 0 : i32
    return %c0_i32, %c0_i32_0 : i32, i32
  }
  func.func @transform_9(%arg0: i32) -> (i32, i32) {
    %c0_i32 = arith.constant 0 : i32
    %c0_i32_0 = arith.constant 0 : i32
    return %c0_i32, %arg0 : i32, i32
  }
}

</mosaic_0001>

<llo_original>
// kernel: critic_forward.1
$region0: #{critic_forward.1}
  #allocation0 [shape = 'u32[]', space=smem, size = 0x4, offset = 0x4, fixed_abs, tag = 'smem constant byte address 0x4 - core index']
  #allocation1 [shape = 'u32[144,128]{1,0:T(1,128)}', space=vmem, size = 0x12000, scoped, tag = 'internal scratch']
  #allocation2 [shape = 'f32[1,1]{1,0:T(1,128)S(1)}', space=vmem, size = 0x200, scoped, tag = 'scoped memory for critic_forward.1']
  %s0 = inlined_call_operand.vmem [shape: f32[256,16], index: 0, kind: input, shape index: {}]
  %s1 = inlined_call_operand.vmem [shape: f32[256,8], index: 1, kind: input, shape index: {}]
  %s2 = inlined_call_operand.vmem [shape: bf16[16,32], index: 2, kind: input, shape index: {}]
  %s3 = inlined_call_operand.vmem [shape: f32[1,32], index: 3, kind: input, shape index: {}]
  %s4 = inlined_call_operand.vmem [shape: bf16[32,32], index: 4, kind: input, shape index: {}]
  %s5 = inlined_call_operand.vmem [shape: bf16[8,32], index: 5, kind: input, shape index: {}]
  %s6 = inlined_call_operand.vmem [shape: f32[1,32], index: 6, kind: input, shape index: {}]
  %s7 = inlined_call_operand.vmem [shape: bf16[1,32], index: 7, kind: input, shape index: {}]
  %s8 = inlined_call_operand.<no memory space> [shape: f32[1,1], index: 8, kind: input, shape index: {}]
  %s9 = inlined_call_operand.hbm [shape: f32[1,256], index: 9, kind: output, shape index: {}]
  %s10 = sld [smem:[#allocation0]]
  $region69: #{critic_forward.1} parent=0
    _
  %s12 = ssub.s32 1, %s10
  %s13 = scalar_select 0, %s12, %s10
  %v14 = vstv %s8
  %15 = vst [vmem:[#allocation2] sm:$0x1] %v14
  $region1: #{critic_forward.1} parent=0
    #allocation3 [shape = 'u8[1024]{0}', space=vmem, size = 0x400, scoped, tag = 'output window, operand 0']
    #allocation4 [shape = 's32[2]{0}', space=sflag, size = 0x8, scoped, tag = 'scoped memory for critic_forward.1']
    %16 = vsyncpa [#allocation4], 0
    %s17 = scalar_lea.sflag [#allocation4], 1
    %18 = vsyncpa %s17, 0
    loop: start=0, step=1, limit=4
    $region2: #{critic_forward.1} parent=1 // loop_pre_header
      _
    $region3: #{critic_forward.1} parent=1 // loop_header
      %s20 = sphi 0, %s24
      %p21 = scmp.ge.s32.totalorder %s20, 4
      %s30 = sphi 0, %s32
      %s33 = sphi 0, %s30
      %s34 = sphi 0, %s33
      %s50 = sphi 0, %s34
      %s56 = sphi 0, %s58
      %s59 = sphi 0, %s56
      %s60 = sphi 0, %s59
      %s76 = sphi 0, %s60
      %s80 = sphi 0, %s80
      %s82 = sphi 0, %s80
      %s83 = sphi 0, %s82
      %s97 = sphi 0, %s83
      %s101 = sphi 0, %s101
      %s103 = sphi 0, %s101
      %s104 = sphi 0, %s103
      %s118 = sphi 0, %s104
      %s122 = sphi 0, %s122
      %s124 = sphi 0, %s122
      %s125 = sphi 0, %s124
      %s139 = sphi 0, %s125
      %s143 = sphi 0, %s143
      %s145 = sphi 0, %s143
      %s146 = sphi 0, %s145
      %s160 = sphi 0, %s146
      %s164 = sphi 0, %s164
      %s166 = sphi 0, %s164
      %s167 = sphi 0, %s166
      %s181 = sphi 0, %s167
      %s185 = sphi 0, %s185
      %s187 = sphi 0, %s185
      %s188 = sphi 0, %s187
      %s202 = sphi 0, %s188
      %s206 = sphi 0, %s206
      %s208 = sphi 0, %s206
      %s209 = sphi 0, %s208
      %s223 = sphi 0, %s209
      %s229 = sphi 0, %s231
      %s232 = sphi 0, %s229
      %s233 = sphi 0, %s232
      %s249 = sphi 0, %s233
    $region4: #{critic_forward.1} parent=1 // loop_header_branch
      %23 = sbr.rel (%p21) target = $region8
    $region5: #{critic_forward.1} parent=1 // loop_body
      %s25 = ssub.s32 %s20, 1
      %s26 = ssub.s32 %s20, 2
      %s27 = sadd.s32 %s20, 1
      %s28 = ssub.s32 %s20, %s27
      %p29 = scmp.eq.s32.totalorder %s28, 0
      %s31 = sadd.s32 %s30, 1
      %s32 = scalar_select %p29, %s30, %s31
      %p35 = pneg %p29
      %p36 = scmp.eq.s32.totalorder %s20, 1
      %p37 = por %p35, %p36
      %p38 = scmp.ne.s32.totalorder %s30, %s33
      %p39 = scmp.eq.s32.totalorder %s20, 0
      %p40 = por %p38, %p39
      %p41 = scmp.ne.s32.totalorder %s30, %s33
      %p42 = scmp.eq.s32.totalorder %s25, 1
      %p43 = por %p41, %p42
      %p44 = scmp.ne.s32.totalorder %s33, %s34
      %p45 = scmp.eq.s32.totalorder %s25, 0
      %p46 = por %p44, %p45
      %p47 = scmp.ne.s32.totalorder %s33, %s34
      %p48 = scmp.eq.s32.totalorder %s26, 1
      %p49 = por %p47, %p48
      %p51 = scmp.ne.s32.totalorder %s34, %s50
      %p52 = scmp.eq.s32.totalorder %s26, 0
      %p53 = por %p51, %p52
      %s54 = ssub.s32 %s20, %s27
      %p55 = scmp.eq.s32.totalorder %s54, 0
      %s57 = sadd.s32 %s56, 1
      %s58 = scalar_select %p55, %s56, %s57
      %p61 = pneg %p55
      %p62 = scmp.eq.s32.totalorder %s20, 1
      %p63 = por %p61, %p62
      %p64 = scmp.ne.s32.totalorder %s56, %s59
      %p65 = scmp.eq.s32.totalorder %s20, 0
      %p66 = por %p64, %p65
      %p67 = scmp.ne.s32.totalorder %s56, %s59
      %p68 = scmp.eq.s32.totalorder %s25, 1
      %p69 = por %p67, %p68
      %p70 = scmp.ne.s32.totalorder %s59, %s60
      %p71 = scmp.eq.s32.totalorder %s25, 0
      %p72 = por %p70, %p71
      %p73 = scmp.ne.s32.totalorder %s59, %s60
      %p74 = scmp.eq.s32.totalorder %s26, 1
      %p75 = por %p73, %p74
      %p77 = scmp.ne.s32.totalorder %s60, %s76
      %p78 = scmp.eq.s32.totalorder %s26, 0
      %p79 = por %p77, %p78
      %s81 = sadd.s32 %s80, 1
      %p84 = scmp.eq.s32.totalorder %s20, 1
      %p85 = scmp.ne.s32.totalorder %s80, %s82
      %p86 = scmp.eq.s32.totalorder %s20, 0
      %p87 = por %p85, %p86
      %p88 = scmp.ne.s32.totalorder %s80, %s82
      %p89 = scmp.eq.s32.totalorder %s25, 1
      %p90 = por %p88, %p89
      %p91 = scmp.ne.s32.totalorder %s82, %s83
      %p92 = scmp.eq.s32.totalorder %s25, 0
      %p93 = por %p91, %p92
      %p94 = scmp.ne.s32.totalorder %s82, %s83
      %p95 = scmp.eq.s32.totalorder %s26, 1
      %p96 = por %p94, %p95
      %p98 = scmp.ne.s32.totalorder %s83, %s97
      %p99 = scmp.eq.s32.totalorder %s26, 0
      %p100 = por %p98, %p99
      %s102 = sadd.s32 %s101, 1
      %p105 = scmp.eq.s32.totalorder %s20, 1
      %p106 = scmp.ne.s32.totalorder %s101, %s103
      %p107 = scmp.eq.s32.totalorder %s20, 0
      %p108 = por %p106, %p107
      %p109 = scmp.ne.s32.totalorder %s101, %s103
      %p110 = scmp.eq.s32.totalorder %s25, 1
      %p111 = por %p109, %p110
      %p112 = scmp.ne.s32.totalorder %s103, %s104
      %p113 = scmp.eq.s32.totalorder %s25, 0
      %p114 = por %p112, %p113
      %p115 = scmp.ne.s32.totalorder %s103, %s104
      %p116 = scmp.eq.s32.totalorder %s26, 1
      %p117 = por %p115, %p116
      %p119 = scmp.ne.s32.totalorder %s104, %s118
      %p120 = scmp.eq.s32.totalorder %s26, 0
      %p121 = por %p119, %p120
      %s123 = sadd.s32 %s122, 1
      %p126 = scmp.eq.s32.totalorder %s20, 1
      %p127 = scmp.ne.s32.totalorder %s122, %s124
      %p128 = scmp.eq.s32.totalorder %s20, 0
      %p129 = por %p127, %p128
      %p130 = scmp.ne.s32.totalorder %s122, %s124
      %p131 = scmp.eq.s32.totalorder %s25, 1
      %p132 = por %p130, %p131
      %p133 = scmp.ne.s32.totalorder %s124, %s125
      %p134 = scmp.eq.s32.totalorder %s25, 0
      %p135 = por %p133, %p134
      %p136 = scmp.ne.s32.totalorder %s124, %s125
      %p137 = scmp.eq.s32.totalorder %s26, 1
      %p138 = por %p136, %p137
      %p140 = scmp.ne.s32.totalorder %s125, %s139
      %p141 = scmp.eq.s32.totalorder %s26, 0
      %p142 = por %p140, %p141
      %s144 = sadd.s32 %s143, 1
      %p147 = scmp.eq.s32.totalorder %s20, 1
      %p148 = scmp.ne.s32.totalorder %s143, %s145
      %p149 = scmp.eq.s32.totalorder %s20, 0
      %p150 = por %p148, %p149
      %p151 = scmp.ne.s32.totalorder %s143, %s145
      %p152 = scmp.eq.s32.totalorder %s25, 1
      %p153 = por %p151, %p152
      %p154 = scmp.ne.s32.totalorder %s145, %s146
      %p155 = scmp.eq.s32.totalorder %s25, 0
      %p156 = por %p154, %p155
      %p157 = scmp.ne.s32.totalorder %s145, %s146
      %p158 = scmp.eq.s32.totalorder %s26, 1
      %p159 = por %p157, %p158
      %p161 = scmp.ne.s32.totalorder %s146, %s160
      %p162 = scmp.eq.s32.totalorder %s26, 0
      %p163 = por %p161, %p162
      %s165 = sadd.s32 %s164, 1
      %p168 = scmp.eq.s32.totalorder %s20, 1
      %p169 = scmp.ne.s32.totalorder %s164, %s166
      %p170 = scmp.eq.s32.totalorder %s20, 0
      %p171 = por %p169, %p170
      %p172 = scmp.ne.s32.totalorder %s164, %s166
      %p173 = scmp.eq.s32.totalorder %s25, 1
      %p174 = por %p172, %p173
      %p175 = scmp.ne.s32.totalorder %s166, %s167
      %p176 = scmp.eq.s32.totalorder %s25, 0
      %p177 = por %p175, %p176
      %p178 = scmp.ne.s32.totalorder %s166, %s167
      %p179 = scmp.eq.s32.totalorder %s26, 1
      %p180 = por %p178, %p179
      %p182 = scmp.ne.s32.totalorder %s167, %s181
      %p183 = scmp.eq.s32.totalorder %s26, 0
      %p184 = por %p182, %p183
      %s186 = sadd.s32 %s185, 1
      %p189 = scmp.eq.s32.totalorder %s20, 1
      %p190 = scmp.ne.s32.totalorder %s185, %s187
      %p191 = scmp.eq.s32.totalorder %s20, 0
      %p192 = por %p190, %p191
      %p193 = scmp.ne.s32.totalorder %s185, %s187
      %p194 = scmp.eq.s32.totalorder %s25, 1
      %p195 = por %p193, %p194
      %p196 = scmp.ne.s32.totalorder %s187, %s188
      %p197 = scmp.eq.s32.totalorder %s25, 0
      %p198 = por %p196, %p197
      %p199 = scmp.ne.s32.totalorder %s187, %s188
      %p200 = scmp.eq.s32.totalorder %s26, 1
      %p201 = por %p199, %p200
      %p203 = scmp.ne.s32.totalorder %s188, %s202
      %p204 = scmp.eq.s32.totalorder %s26, 0
      %p205 = por %p203, %p204
      %s207 = sadd.s32 %s206, 1
      %p210 = scmp.eq.s32.totalorder %s20, 1
      %p211 = scmp.ne.s32.totalorder %s206, %s208
      %p212 = scmp.eq.s32.totalorder %s20, 0
      %p213 = por %p211, %p212
      %p214 = scmp.ne.s32.totalorder %s206, %s208
      %p215 = scmp.eq.s32.totalorder %s25, 1
      %p216 = por %p214, %p215
      %p217 = scmp.ne.s32.totalorder %s208, %s209
      %p218 = scmp.eq.s32.totalorder %s25, 0
      %p219 = por %p217, %p218
      %p220 = scmp.ne.s32.totalorder %s208, %s209
      %p221 = scmp.eq.s32.totalorder %s26, 1
      %p222 = por %p220, %p221
      %p224 = scmp.ne.s32.totalorder %s209, %s223
      %p225 = scmp.eq.s32.totalorder %s26, 0
      %p226 = por %p224, %p225
      %s227 = ssub.s32 %s20, %s27
      %p228 = scmp.eq.s32.totalorder %s227, 0
      %s230 = sadd.s32 %s229, 1
      %s231 = scalar_select %p228, %s229, %s230
      %p234 = pneg %p228
      %p235 = scmp.eq.s32.totalorder %s20, 1
      %p236 = por %p234, %p235
      %p237 = scmp.ne.s32.totalorder %s229, %s232
      %p238 = scmp.eq.s32.totalorder %s20, 0
      %p239 = por %p237, %p238
      %p240 = scmp.ne.s32.totalorder %s229, %s232
      %p241 = scmp.eq.s32.totalorder %s25, 1
      %p242 = por %p240, %p241
      %p243 = scmp.ne.s32.totalorder %s232, %s233
      %p244 = scmp.eq.s32.totalorder %s25, 0
      %p245 = por %p243, %p244
      %p246 = scmp.ne.s32.totalorder %s232, %s233
      %p247 = scmp.eq.s32.totalorder %s26, 1
      %p248 = por %p246, %p247
      %p250 = scmp.ne.s32.totalorder %s233, %s249
      %p251 = scmp.eq.s32.totalorder %s26, 0
      %p252 = por %p250, %p251
      %p253 = scmp.le.s32.totalorder 1, %s20
      %p254 = scmp.lt.s32.totalorder %s20, 3
      %p255 = pnand %p253, %p254
      %p256 = pneg %p255
      // Predicated region
      $region9: #{critic_forward.1} parent=5 // pred_check
        _
      $region10: #{critic_forward.1} parent=5 // pred_check_branch
        %258 = sbr.rel (%p255) target = $region12
      $region11: #{critic_forward.1} parent=5 // pred_region
        %s259 = ssub.s32 %s20, 1
        // Predicated region
        $region13: #{critic_forward.1} parent=11 // pred_check
          %p260 = pneg %p93
        $region14: #{critic_forward.1} parent=11 // pred_check_branch
          %262 = sbr.rel (%p260) target = $region16
        $region15: #{critic_forward.1} parent=11 // pred_region
          _
        $region16: #{critic_forward.1} parent=11 // pred_fallthru
          _
        // Predicated region
        $region17: #{critic_forward.1} parent=11 // pred_check
          %p263 = pneg %p114
        $region18: #{critic_forward.1} parent=11 // pred_check_branch
          %265 = sbr.rel (%p263) target = $region20
        $region19: #{critic_forward.1} parent=11 // pred_region
          _
        $region20: #{critic_forward.1} parent=11 // pred_fallthru
          _
        // Predicated region
        $region21: #{critic_forward.1} parent=11 // pred_check
          %p266 = pneg %p135
        $region22: #{critic_forward.1} parent=11 // pred_check_branch
          %268 = sbr.rel (%p266) target = $region24
        $region23: #{critic_forward.1} parent=11 // pred_region
          _
        $region24: #{critic_forward.1} parent=11 // pred_fallthru
          _
        // Predicated region
        $region25: #{critic_forward.1} parent=11 // pred_check
          %p269 = pneg %p156
        $region26: #{critic_forward.1} parent=11 // pred_check_branch
          %271 = sbr.rel (%p269) target = $region28
        $region27: #{critic_forward.1} parent=11 // pred_region
          _
        $region28: #{critic_forward.1} parent=11 // pred_fallthru
          _
        // Predicated region
        $region29: #{critic_forward.1} parent=11 // pred_check
          %p272 = pneg %p177
        $region30: #{critic_forward.1} parent=11 // pred_check_branch
          %274 = sbr.rel (%p272) target = $region32
        $region31: #{critic_forward.1} parent=11 // pred_region
          _
        $region32: #{critic_forward.1} parent=11 // pred_fallthru
          _
        // Predicated region
        $region33: #{critic_forward.1} parent=11 // pred_check
          %p275 = pneg %p198
        $region34: #{critic_forward.1} parent=11 // pred_check_branch
          %277 = sbr.rel (%p275) target = $region36
        $region35: #{critic_forward.1} parent=11 // pred_region
          _
        $region36: #{critic_forward.1} parent=11 // pred_fallthru
          _
        // Predicated region
        $region37: #{critic_forward.1} parent=11 // pred_check
          %p278 = pneg %p219
        $region38: #{critic_forward.1} parent=11 // pred_check_branch
          %280 = sbr.rel (%p278) target = $region40
        $region39: #{critic_forward.1} parent=11 // pred_region
          _
        $region40: #{critic_forward.1} parent=11 // pred_fallthru
          _
      $region12: #{critic_forward.1} parent=5 // pred_fallthru
        _
      %p281 = scmp.lt.s32.totalorder %s20, 2
      // Predicated region
      $region41: #{critic_forward.1} parent=5 // pred_check
        %p282 = pneg %p281
      $region42: #{critic_forward.1} parent=5 // pred_check_branch
        %284 = sbr.rel (%p282) target = $region44
      $region43: #{critic_forward.1} parent=5 // pred_region
        // Predicated region
        $region45: #{critic_forward.1} parent=43 // pred_check
          %p285 = pneg %p40
        $region46: #{critic_forward.1} parent=43 // pred_check_branch
          %287 = sbr.rel (%p285) target = $region48
        $region47: #{critic_forward.1} parent=43 // pred_region
          %s288 = smul.u32 16, %s20
          %p289 = scmp.lt.s32.totalorder %s288, 31
          %s290 = scalar_select %p289, %s288, 31
          %s291 = smul.addr %s290, 8
          %s292 = scalar_lea.vmem %s0, %s291
          %s293 = smul.u32 16, %s20
        $region48: #{critic_forward.1} parent=43 // pred_fallthru
          _
        // Predicated region
        $region49: #{critic_forward.1} parent=43 // pred_check
          %p294 = pneg %p66
        $region50: #{critic_forward.1} parent=43 // pred_check_branch
          %296 = sbr.rel (%p294) target = $region52
        $region51: #{critic_forward.1} parent=43 // pred_region
          %s297 = smul.u32 16, %s20
          %p298 = scmp.lt.s32.totalorder %s297, 31
          %s299 = scalar_select %p298, %s297, 31
          %s300 = smul.addr %s299, 8
          %s301 = scalar_lea.vmem %s1, %s300
          %s302 = smul.u32 16, %s20
        $region52: #{critic_forward.1} parent=43 // pred_fallthru
          _
      $region44: #{critic_forward.1} parent=5 // pred_fallthru
        _
      %p303 = scmp.le.s32.totalorder 1, %s20
      %p304 = scmp.lt.s32.totalorder %s20, 3
      %p305 = pnand %p303, %p304
      %p306 = pneg %p305
      // Predicated region
      $region53: #{critic_forward.1} parent=5 // pred_check
        _
      $region54: #{critic_forward.1} parent=5 // pred_check_branch
        %308 = sbr.rel (%p305) target = $region56
      $region55: #{critic_forward.1} parent=5 // pred_region
        %s309 = ssub.s32 %s20, 1
        %s310 = smul.u32 16, %s25
        %p311 = scmp.lt.s32.totalorder %s310, 31
        %s312 = scalar_select %p311, %s310, 31
        %s313 = smul.addr %s312, 8
        %s314 = scalar_lea.vmem %s0, %s313
        %p315 = pneg %p46
        %p316 = pneg %p43
        %s317 = smul.u32 16, %s25
        %p318 = scmp.lt.s32.totalorder %s317, 31
        %s319 = scalar_select %p318, %s317, 31
        %s320 = smul.addr %s319, 8
        %s321 = scalar_lea.vmem %s1, %s320
        %p322 = pneg %p72
        %p323 = pneg %p69
        %p324 = pneg %p93
        %p325 = pneg %p90
        %p326 = pneg %p114
        %p327 = pneg %p111
        %p328 = pneg %p135
        %p329 = pneg %p132
        %p330 = pneg %p156
        %p331 = pneg %p153
        %p332 = pneg %p177
        %p333 = pneg %p174
        %p334 = pneg %p198
        %p335 = pneg %p195
        %p336 = pneg %p219
        %p337 = pneg %p216
        %p338 = pneg %p245
        %p339 = pneg %p242
        %s340 = sand.u32 %s232, 1
        %s341 = scalar_lea.sflag [#allocation4], %s340
        %s342 = sand.u32 %s232, 1
        %s343 = scalar_lea.vmem [#allocation3], %s342
        %s344 = smul.u32 16, %s25
        %p345 = scmp.lt.s32.totalorder %s344, 31
        %s346 = scalar_select %p345, %s344, 31
        %s347 = smul.addr %s346, 8
        %s348 = scalar_lea.vmem %s0, %s347
        %s349 = smul.u32 16, %s25
        %s350 = smul.u32 16, %s25
        %p351 = scmp.lt.s32.totalorder %s350, 31
        %s352 = scalar_select %p351, %s350, 31
        %s353 = smul.addr %s352, 8
        %s354 = scalar_lea.vmem %s1, %s353
        %s355 = smul.u32 16, %s25
        %v357 = vld [vmem:[%s348] sm:$0xff]
        %v358 = vld [vmem:[%s348 + $0x8] sm:$0xff]
        %v359 = vld [vmem:[%s348 + $0x10] sm:$0xff]
        %v360 = vld [vmem:[%s348 + $0x18] sm:$0xff]
        %v361 = vld [vmem:[%s348 + $0x20] sm:$0xff]
        %v362 = vld [vmem:[%s348 + $0x28] sm:$0xff]
        %v363 = vld [vmem:[%s348 + $0x30] sm:$0xff]
        %v364 = vld [vmem:[%s348 + $0x38] sm:$0xff]
        %v365 = vld [vmem:[%s348 + $0x40] sm:$0xff]
        %v366 = vld [vmem:[%s348 + $0x48] sm:$0xff]
        %v367 = vld [vmem:[%s348 + $0x50] sm:$0xff]
        %v368 = vld [vmem:[%s348 + $0x58] sm:$0xff]
        %v369 = vld [vmem:[%s348 + $0x60] sm:$0xff]
        %v370 = vld [vmem:[%s348 + $0x68] sm:$0xff]
        %v371 = vld [vmem:[%s348 + $0x70] sm:$0xff]
        %v372 = vld [vmem:[%s348 + $0x78] sm:$0xff]
        %v373 = vpack.c.bf16 %v358, %v357
        %v374 = vpack.c.bf16 %v360, %v359
        %v375 = vpack.c.bf16 %v362, %v361
        %v376 = vpack.c.bf16 %v364, %v363
        %v377 = vpack.c.bf16 %v366, %v365
        %v378 = vpack.c.bf16 %v368, %v367
        %v379 = vpack.c.bf16 %v370, %v369
        %v380 = vpack.c.bf16 %v372, %v371
        %v381 = vld [vmem:[%s354] sm:$0xff]
        %v382 = vld [vmem:[%s354 + $0x8] sm:$0xff]
        %v383 = vld [vmem:[%s354 + $0x10] sm:$0xff]
        %v384 = vld [vmem:[%s354 + $0x18] sm:$0xff]
        %v385 = vld [vmem:[%s354 + $0x20] sm:$0xff]
        %v386 = vld [vmem:[%s354 + $0x28] sm:$0xff]
        %v387 = vld [vmem:[%s354 + $0x30] sm:$0xff]
        %v388 = vld [vmem:[%s354 + $0x38] sm:$0xff]
        %v389 = vld [vmem:[%s354 + $0x40] sm:$0xff]
        %v390 = vld [vmem:[%s354 + $0x48] sm:$0xff]
        %v391 = vld [vmem:[%s354 + $0x50] sm:$0xff]
        %v392 = vld [vmem:[%s354 + $0x58] sm:$0xff]
        %v393 = vld [vmem:[%s354 + $0x60] sm:$0xff]
        %v394 = vld [vmem:[%s354 + $0x68] sm:$0xff]
        %v395 = vld [vmem:[%s354 + $0x70] sm:$0xff]
        %v396 = vld [vmem:[%s354 + $0x78] sm:$0xff]
        %v397 = vpack.c.bf16 %v382, %v381
        %v398 = vpack.c.bf16 %v384, %v383
        %v399 = vpack.c.bf16 %v386, %v385
        %v400 = vpack.c.bf16 %v388, %v387
        %v401 = vpack.c.bf16 %v390, %v389
        %v402 = vpack.c.bf16 %v392, %v391
        %v403 = vpack.c.bf16 %v394, %v393
        %v404 = vpack.c.bf16 %v396, %v395
        %v405 = vld [vmem:[%s2] sm:$0xf]
        %v406 = vld [vmem:[%s2 + $0x4] sm:$0xf]
        %v407 = vld [vmem:[%s3] sm:$0x1]
        %v409 = vlaneseq
        %v410 = vshrl.u32 %v409, 7
        %v411 = vsub.s32 0, %v410
        %v412 = vrot.slane %v407, %v411
        %v416 = vunpack.c.l.b16 %v405
        %v417 = vunpack.c.l.b16 %v406
        %v418 = vpack.c.b16 %v417, %v416
        %vm420 = vcmask 130048
        %v422 = vsel %vm420, %v373, 0
        %v425 = vsel %vm420, %v374, 0
        %v428 = vsel %vm420, %v375, 0
        %v431 = vsel %vm420, %v376, 0
        %v434 = vsel %vm420, %v377, 0
        %v437 = vsel %vm420, %v378, 0
        %v440 = vsel %vm420, %v379, 0
        %v443 = vsel %vm420, %v380, 0
        %445 = vmatprep.subr.bf16.mxu0 0
        %446 = vmatpush1.bf16.msra.mxu0 %v418
        %447 = vmatprep.subr.bf16.mxu0 0
        %448 = vmatpush1.bf16.msra.mxu0 0
        %449 = vmatprep.subr.bf16.mxu0 0
        %450 = vmatpush1.bf16.msra.mxu0 0
        %451 = vmatprep.subr.bf16.mxu0 0
        %452 = vmatpush1.bf16.msra.mxu0 0
        %453 = vmatprep.subr.bf16.mxu0 0
        %454 = vmatpush1.bf16.msra.mxu0 0
        %455 = vmatprep.subr.bf16.mxu0 0
        %456 = vmatpush1.bf16.msra.mxu0 0
        %457 = vmatprep.subr.bf16.mxu0 0
        %458 = vmatpush1.bf16.msra.mxu0 0
        %459 = vmatprep.subr.bf16.mxu0 0
        %460 = vmatpush1.bf16.msra.mxu0 0
        %461 = vmatprep.subr.bf16.mxu0 0
        %462 = vmatpush1.bf16.msra.mxu0 0
        %463 = vmatprep.subr.bf16.mxu0 0
        %464 = vmatpush1.bf16.msra.mxu0 0
        %465 = vmatprep.subr.bf16.mxu0 0
        %466 = vmatpush1.bf16.msra.mxu0 0
        %467 = vmatprep.subr.bf16.mxu0 0
        %468 = vmatpush1.bf16.msra.mxu0 0
        %469 = vmatprep.subr.bf16.mxu0 0
        %470 = vmatpush1.bf16.msra.mxu0 0
        %471 = vmatprep.subr.bf16.mxu0 0
        %472 = vmatpush1.bf16.msra.mxu0 0
        %473 = vmatprep.subr.bf16.mxu0 0
        %474 = vmatpush1.bf16.msra.mxu0 0
        %475 = vmatprep.subr.bf16.mxu0 0
        %476 = vmatpush1.bf16.msra.mxu0 0
        %477 = vmatprep.mubr.bf16.mxu0 0
        %478 = vmatmul.mubr.bf16.gmra.mrb[0].mxu0 %v422
        %v479 = vpop.f32.mrb[0].mxu0
        %v480 = vadd.f32 %v412, %v479
        %v481 = vpop.f32.mrb[0].mxu0
        %v482 = vpop.f32.mrb[0].mxu0
        %v483 = vadd.f32 %v412, %v482
        %v484 = vpop.f32.mrb[0].mxu0
        %485 = vmatprep.mubr.bf16.mxu0 0
        %486 = vmatmul.mubr.bf16.gmra.mrb[0].mxu0 %v425
        %v487 = vpop.f32.mrb[0].mxu0
        %v488 = vadd.f32 %v412, %v487
        %v489 = vpop.f32.mrb[0].mxu0
        %v490 = vpop.f32.mrb[0].mxu0
        %v491 = vadd.f32 %v412, %v490
        %v492 = vpop.f32.mrb[0].mxu0
        %493 = vmatprep.mubr.bf16.mxu0 0
        %494 = vmatmul.mubr.bf16.gmra.mrb[0].mxu0 %v428
        %v495 = vpop.f32.mrb[0].mxu0
        %v496 = vadd.f32 %v412, %v495
        %v497 = vpop.f32.mrb[0].mxu0
        %v498 = vpop.f32.mrb[0].mxu0
        %v499 = vadd.f32 %v412, %v498
        %v500 = vpop.f32.mrb[0].mxu0
        %501 = vmatprep.mubr.bf16.mxu0 0
        %502 = vmatmul.mubr.bf16.gmra.mrb[0].mxu0 %v431
        %v503 = vpop.f32.mrb[0].mxu0
        %v504 = vadd.f32 %v412, %v503
        %v505 = vpop.f32.mrb[0].mxu0
        %v506 = vpop.f32.mrb[0].mxu0
        %v507 = vadd.f32 %v412, %v506
        %v508 = vpop.f32.mrb[0].mxu0
        %509 = vmatprep.mubr.bf16.mxu0 0
        %510 = vmatmul.mubr.bf16.gmra.mrb[0].mxu0 %v434
        %v511 = vpop.f32.mrb[0].mxu0
        %v512 = vadd.f32 %v412, %v511
        %v513 = vpop.f32.mrb[0].mxu0
        %v514 = vpop.f32.mrb[0].mxu0
        %v515 = vadd.f32 %v412, %v514
        %v516 = vpop.f32.mrb[0].mxu0
        %517 = vmatprep.mubr.bf16.mxu0 0
        %518 = vmatmul.mubr.bf16.gmra.mrb[0].mxu0 %v437
        %v519 = vpop.f32.mrb[0].mxu0
        %v520 = vadd.f32 %v412, %v519
        %v521 = vpop.f32.mrb[0].mxu0
        %v522 = vpop.f32.mrb[0].mxu0
        %v523 = vadd.f32 %v412, %v522
        %v524 = vpop.f32.mrb[0].mxu0
        %525 = vmatprep.mubr.bf16.mxu0 0
        %526 = vmatmul.mubr.bf16.gmra.mrb[0].mxu0 %v440
        %v527 = vpop.f32.mrb[0].mxu0
        %v528 = vadd.f32 %v412, %v527
        %v529 = vpop.f32.mrb[0].mxu0
        %v530 = vpop.f32.mrb[0].mxu0
        %v531 = vadd.f32 %v412, %v530
        %v532 = vpop.f32.mrb[0].mxu0
        %533 = vmatprep.mubr.bf16.mxu0 0
        %534 = vmatmul.mubr.bf16.gmra.mrb[0].mxu0 %v443
        %v535 = vpop.f32.mrb[0].mxu0
        %v536 = vadd.f32 %v412, %v535
        %v537 = vpop.f32.mrb[0].mxu0
        %v538 = vpop.f32.mrb[0].mxu0
        %v539 = vadd.f32 %v412, %v538
        %v540 = vpop.f32.mrb[0].mxu0
        %541 = vdwg.mxu0
        %v542 = vmax.f32 %v480, 0.0
        %v543 = vmax.f32 %v483, 0.0
        %v544 = vmax.f32 %v488, 0.0
        %v545 = vmax.f32 %v491, 0.0
        %v546 = vmax.f32 %v496, 0.0
        %v547 = vmax.f32 %v499, 0.0
        %v548 = vmax.f32 %v504, 0.0
        %v549 = vmax.f32 %v507, 0.0
        %v550 = vmax.f32 %v512, 0.0
        %v551 = vmax.f32 %v515, 0.0
        %v552 = vmax.f32 %v520, 0.0
        %v553 = vmax.f32 %v523, 0.0
        %v554 = vmax.f32 %v528, 0.0
        %v555 = vmax.f32 %v531, 0.0
        %v556 = vmax.f32 %v536, 0.0
        %v557 = vmax.f32 %v539, 0.0
        %v558 = vpack.c.bf16 %v543, %v542
        %v559 = vpack.c.bf16 %v545, %v544
        %v560 = vpack.c.bf16 %v547, %v546
        %v561 = vpack.c.bf16 %v549, %v548
        %v562 = vpack.c.bf16 %v551, %v550
        %v563 = vpack.c.bf16 %v553, %v552
        %v564 = vpack.c.bf16 %v555, %v554
        %v565 = vpack.c.bf16 %v557, %v556
        %v566 = vld [vmem:[%s4] sm:$0xf]
        %v567 = vld [vmem:[%s4 + $0x4] sm:$0xf]
        %v568 = vld [vmem:[%s4 + $0x8] sm:$0xf]
        %v569 = vld [vmem:[%s4 + $0xc] sm:$0xf]
        %v570 = vld [vmem:[%s5] sm:$0xf]
        %vm571 = vcmask 64512
        %v573 = vsel %vm571, %v397, 0
        %v576 = vsel %vm571, %v398, 0
        %v579 = vsel %vm571, %v399, 0
        %v582 = vsel %vm571, %v400, 0
        %v585 = vsel %vm571, %v401, 0
        %v588 = vsel %vm571, %v402, 0
        %v591 = vsel %vm571, %v403, 0
        %v594 = vsel %vm571, %v404, 0
        %vm596 = vcmask 1043456
        %v598 = vsel %vm596, %v570, 0
        %600 = vmatprep.subr.bf16.mxu0 0
        %601 = vmatpush1.bf16.msra.mxu0 %v598
        %602 = vmatprep.subr.bf16.mxu0 0
        %603 = vmatpush1.bf16.msra.mxu0 0
        %604 = vmatprep.subr.bf16.mxu0 0
        %605 = vmatpush1.bf16.msra.mxu0 0
        %606 = vmatprep.subr.bf16.mxu0 0
        %607 = vmatpush1.bf16.msra.mxu0 0
        %608 = vmatprep.subr.bf16.mxu0 0
        %609 = vmatpush1.bf16.msra.mxu0 0
        %610 = vmatprep.subr.bf16.mxu0 0
        %611 = vmatpush1.bf16.msra.mxu0 0
        %612 = vmatprep.subr.bf16.mxu0 0
        %613 = vmatpush1.bf16.msra.mxu0 0
        %614 = vmatprep.subr.bf16.mxu0 0
        %615 = vmatpush1.bf16.msra.mxu0 0
        %616 = vmatprep.subr.bf16.mxu0 0
        %617 = vmatpush1.bf16.msra.mxu0 0
        %618 = vmatprep.subr.bf16.mxu0 0
        %619 = vmatpush1.bf16.msra.mxu0 0
        %620 = vmatprep.subr.bf16.mxu0 0
        %621 = vmatpush1.bf16.msra.mxu0 0
        %622 = vmatprep.subr.bf16.mxu0 0
        %623 = vmatpush1.bf16.msra.mxu0 0
        %624 = vmatprep.subr.bf16.mxu0 0
        %625 = vmatpush1.bf16.msra.mxu0 0
        %626 = vmatprep.subr.bf16.mxu0 0
        %627 = vmatpush1.bf16.msra.mxu0 0
        %628 = vmatprep.subr.bf16.mxu0 0
        %629 = vmatpush1.bf16.msra.mxu0 0
        %630 = vmatprep.subr.bf16.mxu0 0
        %631 = vmatpush1.bf16.msra.mxu0 0
        %632 = vmatprep.mubr.bf16.mxu0 0
        %633 = vmatmul.mubr.bf16.gmra.mrb[0].mxu0 %v573
        %v634 = vpop.f32.mrb[0].mxu0
        %v635 = vadd.f32 0.0, %v634
        %v636 = vpop.f32.mrb[0].mxu0
        %v637 = vpop.f32.mrb[0].mxu0
        %v638 = vadd.f32 0.0, %v637
        %v639 = vpop.f32.mrb[0].mxu0
        %640 = vmatprep.mubr.bf16.mxu0 0
        %641 = vmatmul.mubr.bf16.gmra.mrb[0].mxu0 %v576
        %v642 = vpop.f32.mrb[0].mxu0
        %v643 = vadd.f32 0.0, %v642
        %v644 = vpop.f32.mrb[0].mxu0
        %v645 = vpop.f32.mrb[0].mxu0
        %v646 = vadd.f32 0.0, %v645
        %v647 = vpop.f32.mrb[0].mxu0
        %648 = vmatprep.mubr.bf16.mxu0 0
        %649 = vmatmul.mubr.bf16.gmra.mrb[0].mxu0 %v579
        %v650 = vpop.f32.mrb[0].mxu0
        %v651 = vadd.f32 0.0, %v650
        %v652 = vpop.f32.mrb[0].mxu0
        %v653 = vpop.f32.mrb[0].mxu0
        %v654 = vadd.f32 0.0, %v653
        %v655 = vpop.f32.mrb[0].mxu0
        %656 = vmatprep.mubr.bf16.mxu0 0
        %657 = vmatmul.mubr.bf16.gmra.mrb[0].mxu0 %v582
        %v658 = vpop.f32.mrb[0].mxu0
        %v659 = vadd.f32 0.0, %v658
        %v660 = vpop.f32.mrb[0].mxu0
        %v661 = vpop.f32.mrb[0].mxu0
        %v662 = vadd.f32 0.0, %v661
        %v663 = vpop.f32.mrb[0].mxu0
        %664 = vmatprep.mubr.bf16.mxu0 0
        %665 = vmatmul.mubr.bf16.gmra.mrb[0].mxu0 %v585
        %v666 = vpop.f32.mrb[0].mxu0
        %v667 = vadd.f32 0.0, %v666
        %v668 = vpop.f32.mrb[0].mxu0
        %v669 = vpop.f32.mrb[0].mxu0
        %v670 = vadd.f32 0.0, %v669
        %v671 = vpop.f32.mrb[0].mxu0
        %672 = vmatprep.mubr.bf16.mxu0 0
        %673 = vmatmul.mubr.bf16.gmra.mrb[0].mxu0 %v588
        %v674 = vpop.f32.mrb[0].mxu0
        %v675 = vadd.f32 0.0, %v674
        %v676 = vpop.f32.mrb[0].mxu0
        %v677 = vpop.f32.mrb[0].mxu0
        %v678 = vadd.f32 0.0, %v677
        %v679 = vpop.f32.mrb[0].mxu0
        %680 = vmatprep.mubr.bf16.mxu0 0
        %681 = vmatmul.mubr.bf16.gmra.mrb[0].mxu0 %v591
        %v682 = vpop.f32.mrb[0].mxu0
        %v683 = vadd.f32 0.0, %v682
        %v684 = vpop.f32.mrb[0].mxu0
        %v685 = vpop.f32.mrb[0].mxu0
        %v686 = vadd.f32 0.0, %v685
        %v687 = vpop.f32.mrb[0].mxu0
        %688 = vmatprep.mubr.bf16.mxu0 0
        %689 = vmatmul.mubr.bf16.gmra.mrb[0].mxu0 %v594
        %v690 = vpop.f32.mrb[0].mxu0
        %v691 = vadd.f32 0.0, %v690
        %v692 = vpop.f32.mrb[0].mxu0
        %v693 = vpop.f32.mrb[0].mxu0
        %v694 = vadd.f32 0.0, %v693
        %v695 = vpop.f32.mrb[0].mxu0
        %696 = vdwg.mxu0
        %v701 = vunpack.c.l.b16 %v566
        %v702 = vunpack.c.l.b16 %v567
        %v703 = vunpack.c.l.b16 %v568
        %v704 = vunpack.c.l.b16 %v569
        %v705 = vpack.c.b16 %v702, %v701
        %v706 = vpack.c.b16 %v704, %v703
        %vm709 = vcmask 261120
        %v711 = vsel %vm709, %v558, 0
        %v714 = vsel %vm709, %v559, 0
        %v717 = vsel %vm709, %v560, 0
        %v720 = vsel %vm709, %v561, 0
        %v723 = vsel %vm709, %v562, 0
        %v726 = vsel %vm709, %v563, 0
        %v729 = vsel %vm709, %v564, 0
        %v732 = vsel %vm709, %v565, 0
        %734 = vmatprep.subr.bf16.mxu0 0
        %735 = vmatpush1.bf16.msra.mxu0 %v705
        %736 = vmatprep.subr.bf16.mxu0 0
        %737 = vmatpush1.bf16.msra.mxu0 %v706
        %738 = vmatprep.subr.bf16.mxu0 0
        %739 = vmatpush1.bf16.msra.mxu0 0
        %740 = vmatprep.subr.bf16.mxu0 0
        %741 = vmatpush1.bf16.msra.mxu0 0
        %742 = vmatprep.subr.bf16.mxu0 0
        %743 = vmatpush1.bf16.msra.mxu0 0
        %744 = vmatprep.subr.bf16.mxu0 0
        %745 = vmatpush1.bf16.msra.mxu0 0
        %746 = vmatprep.subr.bf16.mxu0 0
        %747 = vmatpush1.bf16.msra.mxu0 0
        %748 = vmatprep.subr.bf16.mxu0 0
        %749 = vmatpush1.bf16.msra.mxu0 0
        %750 = vmatprep.subr.bf16.mxu0 0
        %751 = vmatpush1.bf16.msra.mxu0 0
        %752 = vmatprep.subr.bf16.mxu0 0
        %753 = vmatpush1.bf16.msra.mxu0 0
        %754 = vmatprep.subr.bf16.mxu0 0
        %755 = vmatpush1.bf16.msra.mxu0 0
        %756 = vmatprep.subr.bf16.mxu0 0
        %757 = vmatpush1.bf16.msra.mxu0 0
        %758 = vmatprep.subr.bf16.mxu0 0
        %759 = vmatpush1.bf16.msra.mxu0 0
        %760 = vmatprep.subr.bf16.mxu0 0
        %761 = vmatpush1.bf16.msra.mxu0 0
        %762 = vmatprep.subr.bf16.mxu0 0
        %763 = vmatpush1.bf16.msra.mxu0 0
        %764 = vmatprep.subr.bf16.mxu0 0
        %765 = vmatpush1.bf16.msra.mxu0 0
        %766 = vmatprep.mubr.bf16.mxu0 0
        %767 = vmatmul.mubr.bf16.gmra.mrb[0].mxu0 %v711
        %v768 = vpop.f32.mrb[0].mxu0
        %v769 = vadd.f32 %v635, %v768
        %v770 = vpop.f32.mrb[0].mxu0
        %v771 = vpop.f32.mrb[0].mxu0
        %v772 = vadd.f32 %v638, %v771
        %v773 = vpop.f32.mrb[0].mxu0
        %774 = vmatprep.mubr.bf16.mxu0 0
        %775 = vmatmul.mubr.bf16.gmra.mrb[0].mxu0 %v714
        %v776 = vpop.f32.mrb[0].mxu0
        %v777 = vadd.f32 %v643, %v776
        %v778 = vpop.f32.mrb[0].mxu0
        %v779 = vpop.f32.mrb[0].mxu0
        %v780 = vadd.f32 %v646, %v779
        %v781 = vpop.f32.mrb[0].mxu0
        %782 = vmatprep.mubr.bf16.mxu0 0
        %783 = vmatmul.mubr.bf16.gmra.mrb[0].mxu0 %v717
        %v784 = vpop.f32.mrb[0].mxu0
        %v785 = vadd.f32 %v651, %v784
        %v786 = vpop.f32.mrb[0].mxu0
        %v787 = vpop.f32.mrb[0].mxu0
        %v788 = vadd.f32 %v654, %v787
        %v789 = vpop.f32.mrb[0].mxu0
        %790 = vmatprep.mubr.bf16.mxu0 0
        %791 = vmatmul.mubr.bf16.gmra.mrb[0].mxu0 %v720
        %v792 = vpop.f32.mrb[0].mxu0
        %v793 = vadd.f32 %v659, %v792
        %v794 = vpop.f32.mrb[0].mxu0
        %v795 = vpop.f32.mrb[0].mxu0
        %v796 = vadd.f32 %v662, %v795
        %v797 = vpop.f32.mrb[0].mxu0
        %798 = vmatprep.mubr.bf16.mxu0 0
        %799 = vmatmul.mubr.bf16.gmra.mrb[0].mxu0 %v723
        %v800 = vpop.f32.mrb[0].mxu0
        %v801 = vadd.f32 %v667, %v800
        %v802 = vpop.f32.mrb[0].mxu0
        %v803 = vpop.f32.mrb[0].mxu0
        %v804 = vadd.f32 %v670, %v803
        %v805 = vpop.f32.mrb[0].mxu0
        %806 = vmatprep.mubr.bf16.mxu0 0
        %807 = vmatmul.mubr.bf16.gmra.mrb[0].mxu0 %v726
        %v808 = vpop.f32.mrb[0].mxu0
        %v809 = vadd.f32 %v675, %v808
        %v810 = vpop.f32.mrb[0].mxu0
        %v811 = vpop.f32.mrb[0].mxu0
        %v812 = vadd.f32 %v678, %v811
        %v813 = vpop.f32.mrb[0].mxu0
        %814 = vmatprep.mubr.bf16.mxu0 0
        %815 = vmatmul.mubr.bf16.gmra.mrb[0].mxu0 %v729
        %v816 = vpop.f32.mrb[0].mxu0
        %v817 = vadd.f32 %v683, %v816
        %v818 = vpop.f32.mrb[0].mxu0
        %v819 = vpop.f32.mrb[0].mxu0
        %v820 = vadd.f32 %v686, %v819
        %v821 = vpop.f32.mrb[0].mxu0
        %822 = vmatprep.mubr.bf16.mxu0 0
        %823 = vmatmul.mubr.bf16.gmra.mrb[0].mxu0 %v732
        %v824 = vpop.f32.mrb[0].mxu0
        %v825 = vadd.f32 %v691, %v824
        %v826 = vpop.f32.mrb[0].mxu0
        %v827 = vpop.f32.mrb[0].mxu0
        %v828 = vadd.f32 %v694, %v827
        %v829 = vpop.f32.mrb[0].mxu0
        %830 = vdwg.mxu0
        %v831 = vld [vmem:[%s6] sm:$0x1]
        %v833 = vlaneseq
        %v834 = vshrl.u32 %v833, 7
        %v835 = vsub.s32 0, %v834
        %v836 = vrot.slane %v831, %v835
        %v838 = vadd.f32 %v769, %v836
        %v839 = vadd.f32 %v772, %v836
        %v840 = vadd.f32 %v777, %v836
        %v841 = vadd.f32 %v780, %v836
        %v842 = vadd.f32 %v785, %v836
        %v843 = vadd.f32 %v788, %v836
        %v844 = vadd.f32 %v793, %v836
        %v845 = vadd.f32 %v796, %v836
        %v846 = vadd.f32 %v801, %v836
        %v847 = vadd.f32 %v804, %v836
        %v848 = vadd.f32 %v809, %v836
        %v849 = vadd.f32 %v812, %v836
        %v850 = vadd.f32 %v817, %v836
        %v851 = vadd.f32 %v820, %v836
        %v852 = vadd.f32 %v825, %v836
        %v853 = vadd.f32 %v828, %v836
        %v854 = vmax.f32 %v838, 0.0
        %v855 = vmax.f32 %v839, 0.0
        %v856 = vmax.f32 %v840, 0.0
        %v857 = vmax.f32 %v841, 0.0
        %v858 = vmax.f32 %v842, 0.0
        %v859 = vmax.f32 %v843, 0.0
        %v860 = vmax.f32 %v844, 0.0
        %v861 = vmax.f32 %v845, 0.0
        %v862 = vmax.f32 %v846, 0.0
        %v863 = vmax.f32 %v847, 0.0
        %v864 = vmax.f32 %v848, 0.0
        %v865 = vmax.f32 %v849, 0.0
        %v866 = vmax.f32 %v850, 0.0
        %v867 = vmax.f32 %v851, 0.0
        %v868 = vmax.f32 %v852, 0.0
        %v869 = vmax.f32 %v853, 0.0
        %870 = vxpose.xlu0.b32.start [1/16] %v854, 128
        %871 = vxpose.xlu0.b32.cont [2/16] %v855, 128
        %872 = vxpose.xlu0.b32.cont [3/16] %v856, 128
        %873 = vxpose.xlu0.b32.cont [4/16] %v857, 128
        %874 = vxpose.xlu0.b32.cont [5/16] %v858, 128
        %875 = vxpose.xlu0.b32.cont [6/16] %v859, 128
        %876 = vxpose.xlu0.b32.cont [7/16] %v860, 128
        %877 = vxpose.xlu0.b32.cont [8/16] %v861, 128
        %878 = vxpose.xlu0.b32.cont [9/16] %v862, 128
        %879 = vxpose.xlu0.b32.cont [10/16] %v863, 128
        %880 = vxpose.xlu0.b32.cont [11/16] %v864, 128
        %881 = vxpose.xlu0.b32.cont [12/16] %v865, 128
        %882 = vxpose.xlu0.b32.cont [13/16] %v866, 128
        %883 = vxpose.xlu0.b32.cont [14/16] %v867, 128
        %884 = vxpose.xlu0.b32.cont [15/16] %v868, 128
        %885 = vxpose.xlu0.b32.end [16/16] %v869, 128
        %v886 = vpop.trf.xlu0
        %v887 = vpop.trf.xlu0
        %v888 = vpop.trf.xlu0
        %v889 = vpop.trf.xlu0
        %v890 = vpop.trf.xlu0
        %v891 = vpop.trf.xlu0
        %v892 = vpop.trf.xlu0
        %v893 = vpop.trf.xlu0
        %v894 = vpop.trf.xlu0
        %v895 = vpop.trf.xlu0
        %v896 = vpop.trf.xlu0
        %v897 = vpop.trf.xlu0
        %v898 = vpop.trf.xlu0
        %v899 = vpop.trf.xlu0
        %v900 = vpop.trf.xlu0
        %v901 = vpop.trf.xlu0
        %v902 = vpack.c.bf16 %v887, %v886
        %v903 = vpack.c.bf16 %v889, %v888
        %v904 = vld [vmem:[%s7] sm:$0x1]
        %v905 = vld [vmem:[#allocation2] sm:$0x1]
        %907 = vset.pattern.permute.xlu0 0
        %908 = vperm.xlu0 %907, %v905
        %v909 = vpop.permute.xlu0 %908
        %v911 = vlaneseq
        %v912 = vshrl.u32 %v911, 7
        %v913 = vsub.s32 0, %v912
        %v914 = vrot.slane %v909, %v913
        %v916 = vsel %vm709, %v904, 0
        %918 = vmatprep.subr.bf16.mxu0 0
        %919 = vmatpush1.bf16.msra.mxu0 %v902
        %920 = vmatprep.subr.bf16.mxu0 0
        %921 = vmatpush1.bf16.msra.mxu0 %v903
        %922 = vmatprep.subr.bf16.mxu0 0
        %923 = vmatpush1.bf16.msra.mxu0 0
        %924 = vmatprep.subr.bf16.mxu0 0
        %925 = vmatpush1.bf16.msra.mxu0 0
        %926 = vmatprep.subr.bf16.mxu0 0
        %927 = vmatpush1.bf16.msra.mxu0 0
        %928 = vmatprep.subr.bf16.mxu0 0
        %929 = vmatpush1.bf16.msra.mxu0 0
        %930 = vmatprep.subr.bf16.mxu0 0
        %931 = vmatpush1.bf16.msra.mxu0 0
        %932 = vmatprep.subr.bf16.mxu0 0
        %933 = vmatpush1.bf16.msra.mxu0 0
        %934 = vmatprep.subr.bf16.mxu0 0
        %935 = vmatpush1.bf16.msra.mxu0 0
        %936 = vmatprep.subr.bf16.mxu0 0
        %937 = vmatpush1.bf16.msra.mxu0 0
        %938 = vmatprep.subr.bf16.mxu0 0
        %939 = vmatpush1.bf16.msra.mxu0 0
        %940 = vmatprep.subr.bf16.mxu0 0
        %941 = vmatpush1.bf16.msra.mxu0 0
        %942 = vmatprep.subr.bf16.mxu0 0
        %943 = vmatpush1.bf16.msra.mxu0 0
        %944 = vmatprep.subr.bf16.mxu0 0
        %945 = vmatpush1.bf16.msra.mxu0 0
        %946 = vmatprep.subr.bf16.mxu0 0
        %947 = vmatpush1.bf16.msra.mxu0 0
        %948 = vmatprep.subr.bf16.mxu0 0
        %949 = vmatpush1.bf16.msra.mxu0 0
        %950 = vmatprep.mubr.bf16.mxu0 0
        %951 = vmatmul.mubr.bf16.gmra.mrb[0].mxu0 %v916
        %v952 = vpop.f32.mrb[0].mxu0
        %v953 = vadd.f32 %v914, %v952
        %v954 = vpop.f32.mrb[0].mxu0
        %v955 = vpop.f32.mrb[0].mxu0
        %v956 = vpop.f32.mrb[0].mxu0
        %957 = vdwg.mxu0
        %958 = vst [vmem:[%s343] sm:$0x1] %v953
        %s959 = sand.u32 %s232, 1
        %s960 = scalar_lea.sflag [#allocation4], %s959
        %s961 = sand.u32 %s232, 1
        %s962 = scalar_lea.vmem [#allocation3], %s961
        // Predicated region
        $region57: #{critic_forward.1} parent=55 // pred_check
          %p963 = pneg %p242
        $region58: #{critic_forward.1} parent=55 // pred_check_branch
          %965 = sbr.rel (%p963) target = $region60
        $region59: #{critic_forward.1} parent=55 // pred_region
          %s967 = ssub.s32 16, 16
          %968 = vsyncadd %s960, %s967
          %s969 = smul.addr %s25, 16
          %s970 = scalar_lea.hbm %s9, %s969
          %s972 = sshll.u32 %s962, 4
          %s973 = int_to_ptr.vmem [resolvable:$true] %s972
          %975 = dma.vmem_to_hbm [thread:$0]  %s973, 16, %s970, %s960
        $region60: #{critic_forward.1} parent=55 // pred_fallthru
          _
      $region56: #{critic_forward.1} parent=5 // pred_fallthru
        _
      %p976 = scmp.le.s32.totalorder 2, %s20
      // Predicated region
      $region61: #{critic_forward.1} parent=5 // pred_check
        %p977 = pneg %p976
      $region62: #{critic_forward.1} parent=5 // pred_check_branch
        %979 = sbr.rel (%p977) target = $region64
      $region63: #{critic_forward.1} parent=5 // pred_region
        %s980 = ssub.s32 %s20, 2
        // Predicated region
        $region65: #{critic_forward.1} parent=63 // pred_check
          %p981 = pneg %p248
        $region66: #{critic_forward.1} parent=63 // pred_check_branch
          %983 = sbr.rel (%p981) target = $region68
        $region67: #{critic_forward.1} parent=63 // pred_region
          %s984 = sand.u32 %s233, 1
          %s985 = scalar_lea.sflag [#allocation4], %s984
          %s986 = sand.u32 %s233, 1
          %s987 = scalar_lea.vmem [#allocation3], %s986
          %988 = dma.done %s985, 16
        $region68: #{critic_forward.1} parent=63 // pred_fallthru
          _
      $region64: #{critic_forward.1} parent=5 // pred_fallthru
        _
    $region6: #{critic_forward.1} parent=1 // loop_footer
      %s24 = sadd.s32 1, %s20
    $region7: #{critic_forward.1} parent=1 // loop_footer_branch
      %19 = sbr.rel target = $region3
    $region8: #{critic_forward.1} parent=1 // loop_exit
      _
    %989 = vsyncpa [#allocation4], 1
    %s990 = scalar_lea.sflag [#allocation4], 1
    %991 = vsyncpa %s990, 1

</llo_original>
